<compile_context>
chip_gen: v6e
topology: v6e:2x2x1
jax: 0.10.0
libtpu: 0.0.40
codegen_flags: <defaults>
</compile_context>

<pallas_src>
import functools

import numpy as np
import jax
import jax.numpy as jnp
from jax.experimental import pallas as pl
from jax.experimental.pallas import tpu as pltpu


def _permute_dma_kernel(x_hbm, o_hbm, copy_sems, *, perm):
    """Issue one HBM->HBM DMA per output channel: o[:, c, :] <- x[:, perm[c], :].

    `perm` is a static Python tuple, so the loop unrolls at trace time into C
    independent rectangular-window DMAs (B rows of HW contiguous elements each,
    row stride C*HW).  All copies start before any wait, keeping every DMA
    engine busy; the TensorCore does no vector work at all.
    """
    copies = []
    for out_c, in_c in enumerate(perm):
        cp = pltpu.make_async_copy(
            x_hbm.at[:, pl.ds(in_c, 1), :],
            o_hbm.at[:, pl.ds(out_c, 1), :],
            copy_sems.at[out_c],
        )
        cp.start()
        copies.append(cp)
    for cp in copies:
        cp.wait()


def permute_random_forward(x, perm, perm_inv=None, rev=False):
    """Forward pass of PermuteRandom.  x: (B, C, H, W).  Returns (y, 0.0)."""
    B, C, H, W = x.shape
    HW = H * W
    p = perm_inv if rev else perm
    p = tuple(int(v) for v in np.asarray(p))
    assert len(p) == C and sorted(p) == list(range(C))

    # Free view of contiguous NCHW as (B, C, HW): each DMA row is HW contiguous elems.
    x3 = x.reshape(B, C, HW)
    itemsize = jnp.dtype(x.dtype).itemsize

    y3 = pl.pallas_call(
        functools.partial(_permute_dma_kernel, perm=p),
        out_shape=jax.ShapeDtypeStruct((B, C, HW), x.dtype),
        in_specs=[pl.BlockSpec(memory_space=pl.ANY)],    # raw HBM ref, no auto-DMA
        out_specs=pl.BlockSpec(memory_space=pl.ANY),     # written only via DMAs
        scratch_shapes=[pltpu.SemaphoreType.DMA((C,))],
        cost_estimate=pl.CostEstimate(
            flops=0,
            transcendentals=0,
            bytes_accessed=int(2 * B * C * HW * itemsize)),
        compiler_params=pltpu.CompilerParams(has_side_effects=True),
    )(x3)

    y = y3.reshape(B, C, H, W)
    # A permutation has |det J| = 1 -> log-det is exactly the constant 0.0,
    # matching the PyTorch module (which returns the float 0.0).
    return y, 0.0


if __name__ == "__main__":
    key = jax.random.PRNGKey(0)
    B, C, H, W = 2, 4, 16, 16
    x = jax.random.normal(key, (B, C, H, W), jnp.float32)

    # Fixed random permutation (the module uses numpy RNG; seed for determinism).
    rng = np.random.default_rng(0)
    perm = rng.permutation(C)
    perm_inv = np.argsort(perm)

    fwd = jax.jit(lambda xx: permute_random_forward(xx, perm, perm_inv, rev=False)[0])
    y = jax.block_until_ready(fwd(x))
    assert y.shape == (B, C, H, W)

    # Correctness vs. the module semantics: y = x[:, perm], jac = 0.0.
    y_ref = np.asarray(x)[:, perm]
    np.testing.assert_allclose(np.asarray(y), y_ref, rtol=0, atol=0)

    # Invertibility check (rev=True path).
    bwd = jax.jit(lambda yy: permute_random_forward(yy, perm, perm_inv, rev=True)[0])
    x_rec = jax.block_until_ready(bwd(y))
    np.testing.assert_allclose(np.asarray(x_rec), np.asarray(x), rtol=0, atol=0)

    _, jac = permute_random_forward(x, perm, perm_inv)
    assert float(jac) == 0.0

    print("KERNEL_OK")
</pallas_src>

<mosaic_0001>
module attributes {stable_mosaic.version = 11 : i64} {
  func.func @_permute_dma_kernel(%arg0: memref<2x4x256xf32, #tpu.memory_space<any>>, %arg1: memref<2x4x256xf32, #tpu.memory_space<any>>, %arg2: memref<4x!tpu.dma_semaphore, #tpu.memory_space<semaphore_mem>>) attributes {dimension_semantics = [], scalar_prefetch = 0 : i64, scratch_operands = 1 : i64, tpu.core_type = #tpu.core_type<tc>} {
    %c0_i32 = arith.constant 0 : i32
    %c0_i32_0 = arith.constant 0 : i32
    %c2_i32 = arith.constant 2 : i32
    %c0_i32_1 = arith.constant 0 : i32
    %0 = tpu.memref_slice %arg0[%c0_i32_0, %c2_i32, %c0_i32_1] : memref<2x4x256xf32, #tpu.memory_space<any>> -> memref<2x1x256xf32, #tpu.memory_space<any>>
    %c0_i32_2 = arith.constant 0 : i32
    %c0_i32_3 = arith.constant 0 : i32
    %c0_i32_4 = arith.constant 0 : i32
    %1 = tpu.memref_slice %arg1[%c0_i32_2, %c0_i32_3, %c0_i32_4] : memref<2x4x256xf32, #tpu.memory_space<any>> -> memref<2x1x256xf32, #tpu.memory_space<any>>
    %2 = tpu.memref_slice %arg2[%c0_i32] : memref<4x!tpu.dma_semaphore, #tpu.memory_space<semaphore_mem>> -> memref<1x!tpu.dma_semaphore, #tpu.memory_space<semaphore_mem>>
    %3 = tpu.memref_squeeze %2 : memref<1x!tpu.dma_semaphore, #tpu.memory_space<semaphore_mem>> -> memref<!tpu.dma_semaphore, #tpu.memory_space<semaphore_mem>>
    tpu.enqueue_dma source(%0 : memref<2x1x256xf32, #tpu.memory_space<any>>) target(%1 : memref<2x1x256xf32, #tpu.memory_space<any>>) target_semaphore(%3 : memref<!tpu.dma_semaphore, #tpu.memory_space<semaphore_mem>>)
    %c1_i32 = arith.constant 1 : i32
    %c0_i32_5 = arith.constant 0 : i32
    %c0_i32_6 = arith.constant 0 : i32
    %c0_i32_7 = arith.constant 0 : i32
    %4 = tpu.memref_slice %arg0[%c0_i32_5, %c0_i32_6, %c0_i32_7] : memref<2x4x256xf32, #tpu.memory_space<any>> -> memref<2x1x256xf32, #tpu.memory_space<any>>
    %c0_i32_8 = arith.constant 0 : i32
    %c1_i32_9 = arith.constant 1 : i32
    %c0_i32_10 = arith.constant 0 : i32
    %5 = tpu.memref_slice %arg1[%c0_i32_8, %c1_i32_9, %c0_i32_10] : memref<2x4x256xf32, #tpu.memory_space<any>> -> memref<2x1x256xf32, #tpu.memory_space<any>>
    %6 = tpu.memref_slice %arg2[%c1_i32] : memref<4x!tpu.dma_semaphore, #tpu.memory_space<semaphore_mem>> -> memref<1x!tpu.dma_semaphore, #tpu.memory_space<semaphore_mem>>
    %7 = tpu.memref_squeeze %6 : memref<1x!tpu.dma_semaphore, #tpu.memory_space<semaphore_mem>> -> memref<!tpu.dma_semaphore, #tpu.memory_space<semaphore_mem>>
    tpu.enqueue_dma source(%4 : memref<2x1x256xf32, #tpu.memory_space<any>>) target(%5 : memref<2x1x256xf32, #tpu.memory_space<any>>) target_semaphore(%7 : memref<!tpu.dma_semaphore, #tpu.memory_space<semaphore_mem>>)
    %c2_i32_11 = arith.constant 2 : i32
    %c0_i32_12 = arith.constant 0 : i32
    %c1_i32_13 = arith.constant 1 : i32
    %c0_i32_14 = arith.constant 0 : i32
    %8 = tpu.memref_slice %arg0[%c0_i32_12, %c1_i32_13, %c0_i32_14] : memref<2x4x256xf32, #tpu.memory_space<any>> -> memref<2x1x256xf32, #tpu.memory_space<any>>
    %c0_i32_15 = arith.constant 0 : i32
    %c2_i32_16 = arith.constant 2 : i32
    %c0_i32_17 = arith.constant 0 : i32
    %9 = tpu.memref_slice %arg1[%c0_i32_15, %c2_i32_16, %c0_i32_17] : memref<2x4x256xf32, #tpu.memory_space<any>> -> memref<2x1x256xf32, #tpu.memory_space<any>>
    %10 = tpu.memref_slice %arg2[%c2_i32_11] : memref<4x!tpu.dma_semaphore, #tpu.memory_space<semaphore_mem>> -> memref<1x!tpu.dma_semaphore, #tpu.memory_space<semaphore_mem>>
    %11 = tpu.memref_squeeze %10 : memref<1x!tpu.dma_semaphore, #tpu.memory_space<semaphore_mem>> -> memref<!tpu.dma_semaphore, #tpu.memory_space<semaphore_mem>>
    tpu.enqueue_dma source(%8 : memref<2x1x256xf32, #tpu.memory_space<any>>) target(%9 : memref<2x1x256xf32, #tpu.memory_space<any>>) target_semaphore(%11 : memref<!tpu.dma_semaphore, #tpu.memory_space<semaphore_mem>>)
    %c3_i32 = arith.constant 3 : i32
    %c0_i32_18 = arith.constant 0 : i32
    %c3_i32_19 = arith.constant 3 : i32
    %c0_i32_20 = arith.constant 0 : i32
    %12 = tpu.memref_slice %arg0[%c0_i32_18, %c3_i32_19, %c0_i32_20] : memref<2x4x256xf32, #tpu.memory_space<any>> -> memref<2x1x256xf32, #tpu.memory_space<any>>
    %c0_i32_21 = arith.constant 0 : i32
    %c3_i32_22 = arith.constant 3 : i32
    %c0_i32_23 = arith.constant 0 : i32
    %13 = tpu.memref_slice %arg1[%c0_i32_21, %c3_i32_22, %c0_i32_23] : memref<2x4x256xf32, #tpu.memory_space<any>> -> memref<2x1x256xf32, #tpu.memory_space<any>>
    %14 = tpu.memref_slice %arg2[%c3_i32] : memref<4x!tpu.dma_semaphore, #tpu.memory_space<semaphore_mem>> -> memref<1x!tpu.dma_semaphore, #tpu.memory_space<semaphore_mem>>
    %15 = tpu.memref_squeeze %14 : memref<1x!tpu.dma_semaphore, #tpu.memory_space<semaphore_mem>> -> memref<!tpu.dma_semaphore, #tpu.memory_space<semaphore_mem>>
    tpu.enqueue_dma source(%12 : memref<2x1x256xf32, #tpu.memory_space<any>>) target(%13 : memref<2x1x256xf32, #tpu.memory_space<any>>) target_semaphore(%15 : memref<!tpu.dma_semaphore, #tpu.memory_space<semaphore_mem>>)
    %c0_i32_24 = arith.constant 0 : i32
    %c0_i32_25 = arith.constant 0 : i32
    %c2_i32_26 = arith.constant 2 : i32
    %c0_i32_27 = arith.constant 0 : i32
    %16 = tpu.memref_slice %arg0[%c0_i32_25, %c2_i32_26, %c0_i32_27] : memref<2x4x256xf32, #tpu.memory_space<any>> -> memref<2x1x256xf32, #tpu.memory_space<any>>
    %c0_i32_28 = arith.constant 0 : i32
    %c0_i32_29 = arith.constant 0 : i32
    %c0_i32_30 = arith.constant 0 : i32
    %17 = tpu.memref_slice %arg1[%c0_i32_28, %c0_i32_29, %c0_i32_30] : memref<2x4x256xf32, #tpu.memory_space<any>> -> memref<2x1x256xf32, #tpu.memory_space<any>>
    %18 = tpu.memref_slice %arg2[%c0_i32_24] : memref<4x!tpu.dma_semaphore, #tpu.memory_space<semaphore_mem>> -> memref<1x!tpu.dma_semaphore, #tpu.memory_space<semaphore_mem>>
    %19 = tpu.memref_squeeze %18 : memref<1x!tpu.dma_semaphore, #tpu.memory_space<semaphore_mem>> -> memref<!tpu.dma_semaphore, #tpu.memory_space<semaphore_mem>>
    tpu.wait_dma2 semaphore(%19 : memref<!tpu.dma_semaphore, #tpu.memory_space<semaphore_mem>>) src(%16 : memref<2x1x256xf32, #tpu.memory_space<any>>) dst(%17 : memref<2x1x256xf32, #tpu.memory_space<any>>)
    %c1_i32_31 = arith.constant 1 : i32
    %c0_i32_32 = arith.constant 0 : i32
    %c0_i32_33 = arith.constant 0 : i32
    %c0_i32_34 = arith.constant 0 : i32
    %20 = tpu.memref_slice %arg0[%c0_i32_32, %c0_i32_33, %c0_i32_34] : memref<2x4x256xf32, #tpu.memory_space<any>> -> memref<2x1x256xf32, #tpu.memory_space<any>>
    %c0_i32_35 = arith.constant 0 : i32
    %c1_i32_36 = arith.constant 1 : i32
    %c0_i32_37 = arith.constant 0 : i32
    %21 = tpu.memref_slice %arg1[%c0_i32_35, %c1_i32_36, %c0_i32_37] : memref<2x4x256xf32, #tpu.memory_space<any>> -> memref<2x1x256xf32, #tpu.memory_space<any>>
    %22 = tpu.memref_slice %arg2[%c1_i32_31] : memref<4x!tpu.dma_semaphore, #tpu.memory_space<semaphore_mem>> -> memref<1x!tpu.dma_semaphore, #tpu.memory_space<semaphore_mem>>
    %23 = tpu.memref_squeeze %22 : memref<1x!tpu.dma_semaphore, #tpu.memory_space<semaphore_mem>> -> memref<!tpu.dma_semaphore, #tpu.memory_space<semaphore_mem>>
    tpu.wait_dma2 semaphore(%23 : memref<!tpu.dma_semaphore, #tpu.memory_space<semaphore_mem>>) src(%20 : memref<2x1x256xf32, #tpu.memory_space<any>>) dst(%21 : memref<2x1x256xf32, #tpu.memory_space<any>>)
    %c2_i32_38 = arith.constant 2 : i32
    %c0_i32_39 = arith.constant 0 : i32
    %c1_i32_40 = arith.constant 1 : i32
    %c0_i32_41 = arith.constant 0 : i32
    %24 = tpu.memref_slice %arg0[%c0_i32_39, %c1_i32_40, %c0_i32_41] : memref<2x4x256xf32, #tpu.memory_space<any>> -> memref<2x1x256xf32, #tpu.memory_space<any>>
    %c0_i32_42 = arith.constant 0 : i32
    %c2_i32_43 = arith.constant 2 : i32
    %c0_i32_44 = arith.constant 0 : i32
    %25 = tpu.memref_slice %arg1[%c0_i32_42, %c2_i32_43, %c0_i32_44] : memref<2x4x256xf32, #tpu.memory_space<any>> -> memref<2x1x256xf32, #tpu.memory_space<any>>
    %26 = tpu.memref_slice %arg2[%c2_i32_38] : memref<4x!tpu.dma_semaphore, #tpu.memory_space<semaphore_mem>> -> memref<1x!tpu.dma_semaphore, #tpu.memory_space<semaphore_mem>>
    %27 = tpu.memref_squeeze %26 : memref<1x!tpu.dma_semaphore, #tpu.memory_space<semaphore_mem>> -> memref<!tpu.dma_semaphore, #tpu.memory_space<semaphore_mem>>
    tpu.wait_dma2 semaphore(%27 : memref<!tpu.dma_semaphore, #tpu.memory_space<semaphore_mem>>) src(%24 : memref<2x1x256xf32, #tpu.memory_space<any>>) dst(%25 : memref<2x1x256xf32, #tpu.memory_space<any>>)
    %c3_i32_45 = arith.constant 3 : i32
    %c0_i32_46 = arith.constant 0 : i32
    %c3_i32_47 = arith.constant 3 : i32
    %c0_i32_48 = arith.constant 0 : i32
    %28 = tpu.memref_slice %arg0[%c0_i32_46, %c3_i32_47, %c0_i32_48] : memref<2x4x256xf32, #tpu.memory_space<any>> -> memref<2x1x256xf32, #tpu.memory_space<any>>
    %c0_i32_49 = arith.constant 0 : i32
    %c3_i32_50 = arith.constant 3 : i32
    %c0_i32_51 = arith.constant 0 : i32
    %29 = tpu.memref_slice %arg1[%c0_i32_49, %c3_i32_50, %c0_i32_51] : memref<2x4x256xf32, #tpu.memory_space<any>> -> memref<2x1x256xf32, #tpu.memory_space<any>>
    %30 = tpu.memref_slice %arg2[%c3_i32_45] : memref<4x!tpu.dma_semaphore, #tpu.memory_space<semaphore_mem>> -> memref<1x!tpu.dma_semaphore, #tpu.memory_space<semaphore_mem>>
    %31 = tpu.memref_squeeze %30 : memref<1x!tpu.dma_semaphore, #tpu.memory_space<semaphore_mem>> -> memref<!tpu.dma_semaphore, #tpu.memory_space<semaphore_mem>>
    tpu.wait_dma2 semaphore(%31 : memref<!tpu.dma_semaphore, #tpu.memory_space<semaphore_mem>>) src(%28 : memref<2x1x256xf32, #tpu.memory_space<any>>) dst(%29 : memref<2x1x256xf32, #tpu.memory_space<any>>)
    return
  }
}

</mosaic_0001>

<llo_original>
// kernel: _lambda_.1
$region0: #{_lambda_.1}
  #allocation0 [shape = 'u32[]', space=smem, size = 0x4, offset = 0x4, fixed_abs, tag = 'smem constant byte address 0x4 - core index']
  #allocation1 [shape = 'u32[144,128]{1,0:T(1,128)}', space=vmem, size = 0x12000, scoped, tag = 'internal scratch']
  #allocation2 [shape = 's32[4]{0}', space=sflag, size = 0x10, scoped, tag = 'scratch operand']
  #allocation3 [shape = 's32[]', space=sflag, size = 0x4, offset = 0, fixed_abs, tag = 'sflag constant byte address 0x0 - dummy sync flag']
  #allocation4 [shape = 's32[]', space=sflag, size = 0x4, offset = 0, fixed_abs, tag = 'sflag constant byte address 0x0 - dummy sync flag']
  #allocation5 [shape = 's32[]', space=sflag, size = 0x4, offset = 0, fixed_abs, tag = 'sflag constant byte address 0x0 - dummy sync flag']
  #allocation6 [shape = 's32[]', space=sflag, size = 0x4, offset = 0, fixed_abs, tag = 'sflag constant byte address 0x0 - dummy sync flag']
  %s0 = inlined_call_operand.vmem [shape: f32[2,4,256], index: 0, kind: input, shape index: {}]
  %s1 = inlined_call_operand.vmem [shape: f32[2,4,256], index: 1, kind: output, shape index: {}]
  %s2 = sld [smem:[#allocation0]]
  $region122: #{_lambda_.1} parent=0
    _
  %s4 = ssub.s32 1, %s2
  %s5 = scalar_select 0, %s4, %s2
  %s6 = scalar_lea.vmem %s0, 2
  %p8 = scmp.lt.u32.totalorder 1, 8
  %p9 = pneg %p8
  // Predicated region
  $region2: #{_lambda_.1} parent=0 // pred_check
    _
  $region3: #{_lambda_.1} parent=0 // pred_check_branch
    %11 = sbr.rel (%p8) target = $region5
  $region4: #{_lambda_.1} parent=0 // pred_region
    %s33 = sand.u32 1, 7
    %p34 = scmp.eq.s32.totalorder %s33, 0
    %p35 = pneg %p34
    // Predicated region
    $region17: #{_lambda_.1} parent=4 // pred_check
      _
    $region18: #{_lambda_.1} parent=4 // pred_check_branch
      %37 = sbr.rel (%p34) target = $region20
    $region19: #{_lambda_.1} parent=4 // pred_region
      %s38 = sand.u32 1, 7
      %s39 = ssub.s32 1, %s38
      %s40 = scalar_lea.vmem %s6, %s39
      %s41 = ssub.s32 1, %s38
      %s42 = scalar_lea.vmem %s1, %s41
      %s43 = sshll.u32 1, %s38
      %s44 = ssub.s32 %s43, 1
      loop: start=0, step=1, limit=1
      $region21: #{_lambda_.1} parent=19 // loop_pre_header
        _
      $region22: #{_lambda_.1} parent=19 // loop_header
        %s46 = sphi 0, %s50
        %p47 = scmp.ge.s32.totalorder %s46, 1
        %s51 = sphi %s40, %s40
        %s52 = sphi %s42, %s42
      $region23: #{_lambda_.1} parent=19 // loop_header_branch
        %49 = sbr.rel (%p47) target = $region27
      $region24: #{_lambda_.1} parent=19 // loop_body
        %v53 = vld [vmem:[%s51] sm:%s44]
        %54 = vst [vmem:[%s52] sm:%s44] %v53
        %v55 = vld [vmem:[%s51 + $0x4] sm:%s44]
        %56 = vst [vmem:[%s52 + $0x4] sm:%s44] %v55
        %v57 = vld [vmem:[%s51 + $0x8] sm:%s44]
        %58 = vst [vmem:[%s52 + $0x8] sm:%s44] %v57
        %v59 = vld [vmem:[%s51 + $0xc] sm:%s44]
        %60 = vst [vmem:[%s52 + $0xc] sm:%s44] %v59
      $region25: #{_lambda_.1} parent=19 // loop_footer
        %s50 = sadd.s32 1, %s46
      $region26: #{_lambda_.1} parent=19 // loop_footer_branch
        %45 = sbr.rel target = $region22
      $region27: #{_lambda_.1} parent=19 // loop_exit
        _
    $region20: #{_lambda_.1} parent=4 // pred_fallthru
      _
  $region5: #{_lambda_.1} parent=0 // pred_fallthru
    _
  // Predicated region
  $region6: #{_lambda_.1} parent=0 // pred_check
    %p12 = pneg %p8
  $region7: #{_lambda_.1} parent=0 // pred_check_branch
    %14 = sbr.rel (%p12) target = $region9
  $region8: #{_lambda_.1} parent=0 // pred_region
    %s15 = sshll.u32 1, 1
    %s16 = ssub.s32 %s15, 1
    loop: start=0, step=1, limit=1
    $region10: #{_lambda_.1} parent=8 // loop_pre_header
      _
    $region11: #{_lambda_.1} parent=8 // loop_header
      %s18 = sphi 0, %s22
      %p19 = scmp.ge.s32.totalorder %s18, 1
      %s23 = sphi %s6, %s6
      %s24 = sphi %s1, %s1
    $region12: #{_lambda_.1} parent=8 // loop_header_branch
      %21 = sbr.rel (%p19) target = $region16
    $region13: #{_lambda_.1} parent=8 // loop_body
      %v25 = vld [vmem:[%s23] sm:%s16]
      %26 = vst [vmem:[%s24] sm:%s16] %v25
      %v27 = vld [vmem:[%s23 + $0x4] sm:%s16]
      %28 = vst [vmem:[%s24 + $0x4] sm:%s16] %v27
      %v29 = vld [vmem:[%s23 + $0x8] sm:%s16]
      %30 = vst [vmem:[%s24 + $0x8] sm:%s16] %v29
      %v31 = vld [vmem:[%s23 + $0xc] sm:%s16]
      %32 = vst [vmem:[%s24 + $0xc] sm:%s16] %v31
    $region14: #{_lambda_.1} parent=8 // loop_footer
      %s22 = sadd.s32 1, %s18
    $region15: #{_lambda_.1} parent=8 // loop_footer_branch
      %17 = sbr.rel target = $region11
    $region16: #{_lambda_.1} parent=8 // loop_exit
      _
  $region9: #{_lambda_.1} parent=0 // pred_fallthru
    _
  // Predicated region
  $region28: #{_lambda_.1} parent=0 // pred_check
    _
  $region29: #{_lambda_.1} parent=0 // pred_check_branch
    %63 = sbr.rel (0) target = $region31
  $region30: #{_lambda_.1} parent=0 // pred_region
    %64 = vsyncadd [#allocation2], 64
  $region31: #{_lambda_.1} parent=0 // pred_fallthru
    _
  %s65 = scalar_lea.vmem %s1, 1
  %s66 = scalar_lea.sflag [#allocation2], 1
  %p68 = scmp.lt.u32.totalorder 1, 8
  %p69 = pneg %p68
  // Predicated region
  $region32: #{_lambda_.1} parent=0 // pred_check
    _
  $region33: #{_lambda_.1} parent=0 // pred_check_branch
    %71 = sbr.rel (%p68) target = $region35
  $region34: #{_lambda_.1} parent=0 // pred_region
    %s93 = sand.u32 1, 7
    %p94 = scmp.eq.s32.totalorder %s93, 0
    %p95 = pneg %p94
    // Predicated region
    $region47: #{_lambda_.1} parent=34 // pred_check
      _
    $region48: #{_lambda_.1} parent=34 // pred_check_branch
      %97 = sbr.rel (%p94) target = $region50
    $region49: #{_lambda_.1} parent=34 // pred_region
      %s98 = sand.u32 1, 7
      %s99 = ssub.s32 1, %s98
      %s100 = scalar_lea.vmem %s0, %s99
      %s101 = ssub.s32 1, %s98
      %s102 = scalar_lea.vmem %s65, %s101
      %s103 = sshll.u32 1, %s98
      %s104 = ssub.s32 %s103, 1
      loop: start=0, step=1, limit=1
      $region51: #{_lambda_.1} parent=49 // loop_pre_header
        _
      $region52: #{_lambda_.1} parent=49 // loop_header
        %s106 = sphi 0, %s110
        %p107 = scmp.ge.s32.totalorder %s106, 1
        %s111 = sphi %s100, %s100
        %s112 = sphi %s102, %s102
      $region53: #{_lambda_.1} parent=49 // loop_header_branch
        %109 = sbr.rel (%p107) target = $region57
      $region54: #{_lambda_.1} parent=49 // loop_body
        %v113 = vld [vmem:[%s111] sm:%s104]
        %114 = vst [vmem:[%s112] sm:%s104] %v113
        %v115 = vld [vmem:[%s111 + $0x4] sm:%s104]
        %116 = vst [vmem:[%s112 + $0x4] sm:%s104] %v115
        %v117 = vld [vmem:[%s111 + $0x8] sm:%s104]
        %118 = vst [vmem:[%s112 + $0x8] sm:%s104] %v117
        %v119 = vld [vmem:[%s111 + $0xc] sm:%s104]
        %120 = vst [vmem:[%s112 + $0xc] sm:%s104] %v119
      $region55: #{_lambda_.1} parent=49 // loop_footer
        %s110 = sadd.s32 1, %s106
      $region56: #{_lambda_.1} parent=49 // loop_footer_branch
        %105 = sbr.rel target = $region52
      $region57: #{_lambda_.1} parent=49 // loop_exit
        _
    $region50: #{_lambda_.1} parent=34 // pred_fallthru
      _
  $region35: #{_lambda_.1} parent=0 // pred_fallthru
    _
  // Predicated region
  $region36: #{_lambda_.1} parent=0 // pred_check
    %p72 = pneg %p68
  $region37: #{_lambda_.1} parent=0 // pred_check_branch
    %74 = sbr.rel (%p72) target = $region39
  $region38: #{_lambda_.1} parent=0 // pred_region
    %s75 = sshll.u32 1, 1
    %s76 = ssub.s32 %s75, 1
    loop: start=0, step=1, limit=1
    $region40: #{_lambda_.1} parent=38 // loop_pre_header
      _
    $region41: #{_lambda_.1} parent=38 // loop_header
      %s78 = sphi 0, %s82
      %p79 = scmp.ge.s32.totalorder %s78, 1
      %s83 = sphi %s0, %s0
      %s84 = sphi %s65, %s65
    $region42: #{_lambda_.1} parent=38 // loop_header_branch
      %81 = sbr.rel (%p79) target = $region46
    $region43: #{_lambda_.1} parent=38 // loop_body
      %v85 = vld [vmem:[%s83] sm:%s76]
      %86 = vst [vmem:[%s84] sm:%s76] %v85
      %v87 = vld [vmem:[%s83 + $0x4] sm:%s76]
      %88 = vst [vmem:[%s84 + $0x4] sm:%s76] %v87
      %v89 = vld [vmem:[%s83 + $0x8] sm:%s76]
      %90 = vst [vmem:[%s84 + $0x8] sm:%s76] %v89
      %v91 = vld [vmem:[%s83 + $0xc] sm:%s76]
      %92 = vst [vmem:[%s84 + $0xc] sm:%s76] %v91
    $region44: #{_lambda_.1} parent=38 // loop_footer
      %s82 = sadd.s32 1, %s78
    $region45: #{_lambda_.1} parent=38 // loop_footer_branch
      %77 = sbr.rel target = $region41
    $region46: #{_lambda_.1} parent=38 // loop_exit
      _
  $region39: #{_lambda_.1} parent=0 // pred_fallthru
    _
  // Predicated region
  $region58: #{_lambda_.1} parent=0 // pred_check
    _
  $region59: #{_lambda_.1} parent=0 // pred_check_branch
    %123 = sbr.rel (0) target = $region61
  $region60: #{_lambda_.1} parent=0 // pred_region
    %124 = vsyncadd %s66, 64
  $region61: #{_lambda_.1} parent=0 // pred_fallthru
    _
  %s125 = scalar_lea.vmem %s0, 1
  %s126 = scalar_lea.vmem %s1, 2
  %s127 = scalar_lea.sflag [#allocation2], 2
  %p129 = scmp.lt.u32.totalorder 1, 8
  %p130 = pneg %p129
  // Predicated region
  $region62: #{_lambda_.1} parent=0 // pred_check
    _
  $region63: #{_lambda_.1} parent=0 // pred_check_branch
    %132 = sbr.rel (%p129) target = $region65
  $region64: #{_lambda_.1} parent=0 // pred_region
    %s154 = sand.u32 1, 7
    %p155 = scmp.eq.s32.totalorder %s154, 0
    %p156 = pneg %p155
    // Predicated region
    $region77: #{_lambda_.1} parent=64 // pred_check
      _
    $region78: #{_lambda_.1} parent=64 // pred_check_branch
      %158 = sbr.rel (%p155) target = $region80
    $region79: #{_lambda_.1} parent=64 // pred_region
      %s159 = sand.u32 1, 7
      %s160 = ssub.s32 1, %s159
      %s161 = scalar_lea.vmem %s125, %s160
      %s162 = ssub.s32 1, %s159
      %s163 = scalar_lea.vmem %s126, %s162
      %s164 = sshll.u32 1, %s159
      %s165 = ssub.s32 %s164, 1
      loop: start=0, step=1, limit=1
      $region81: #{_lambda_.1} parent=79 // loop_pre_header
        _
      $region82: #{_lambda_.1} parent=79 // loop_header
        %s167 = sphi 0, %s171
        %p168 = scmp.ge.s32.totalorder %s167, 1
        %s172 = sphi %s161, %s161
        %s173 = sphi %s163, %s163
      $region83: #{_lambda_.1} parent=79 // loop_header_branch
        %170 = sbr.rel (%p168) target = $region87
      $region84: #{_lambda_.1} parent=79 // loop_body
        %v174 = vld [vmem:[%s172] sm:%s165]
        %175 = vst [vmem:[%s173] sm:%s165] %v174
        %v176 = vld [vmem:[%s172 + $0x4] sm:%s165]
        %177 = vst [vmem:[%s173 + $0x4] sm:%s165] %v176
        %v178 = vld [vmem:[%s172 + $0x8] sm:%s165]
        %179 = vst [vmem:[%s173 + $0x8] sm:%s165] %v178
        %v180 = vld [vmem:[%s172 + $0xc] sm:%s165]
        %181 = vst [vmem:[%s173 + $0xc] sm:%s165] %v180
      $region85: #{_lambda_.1} parent=79 // loop_footer
        %s171 = sadd.s32 1, %s167
      $region86: #{_lambda_.1} parent=79 // loop_footer_branch
        %166 = sbr.rel target = $region82
      $region87: #{_lambda_.1} parent=79 // loop_exit
        _
    $region80: #{_lambda_.1} parent=64 // pred_fallthru
      _
  $region65: #{_lambda_.1} parent=0 // pred_fallthru
    _
  // Predicated region
  $region66: #{_lambda_.1} parent=0 // pred_check
    %p133 = pneg %p129
  $region67: #{_lambda_.1} parent=0 // pred_check_branch
    %135 = sbr.rel (%p133) target = $region69
  $region68: #{_lambda_.1} parent=0 // pred_region
    %s136 = sshll.u32 1, 1
    %s137 = ssub.s32 %s136, 1
    loop: start=0, step=1, limit=1
    $region70: #{_lambda_.1} parent=68 // loop_pre_header
      _
    $region71: #{_lambda_.1} parent=68 // loop_header
      %s139 = sphi 0, %s143
      %p140 = scmp.ge.s32.totalorder %s139, 1
      %s144 = sphi %s125, %s125
      %s145 = sphi %s126, %s126
    $region72: #{_lambda_.1} parent=68 // loop_header_branch
      %142 = sbr.rel (%p140) target = $region76
    $region73: #{_lambda_.1} parent=68 // loop_body
      %v146 = vld [vmem:[%s144] sm:%s137]
      %147 = vst [vmem:[%s145] sm:%s137] %v146
      %v148 = vld [vmem:[%s144 + $0x4] sm:%s137]
      %149 = vst [vmem:[%s145 + $0x4] sm:%s137] %v148
      %v150 = vld [vmem:[%s144 + $0x8] sm:%s137]
      %151 = vst [vmem:[%s145 + $0x8] sm:%s137] %v150
      %v152 = vld [vmem:[%s144 + $0xc] sm:%s137]
      %153 = vst [vmem:[%s145 + $0xc] sm:%s137] %v152
    $region74: #{_lambda_.1} parent=68 // loop_footer
      %s143 = sadd.s32 1, %s139
    $region75: #{_lambda_.1} parent=68 // loop_footer_branch
      %138 = sbr.rel target = $region71
    $region76: #{_lambda_.1} parent=68 // loop_exit
      _
  $region69: #{_lambda_.1} parent=0 // pred_fallthru
    _
  // Predicated region
  $region88: #{_lambda_.1} parent=0 // pred_check
    _
  $region89: #{_lambda_.1} parent=0 // pred_check_branch
    %184 = sbr.rel (0) target = $region91
  $region90: #{_lambda_.1} parent=0 // pred_region
    %185 = vsyncadd %s127, 64
  $region91: #{_lambda_.1} parent=0 // pred_fallthru
    _
  %s186 = scalar_lea.vmem %s0, 3
  %s187 = scalar_lea.vmem %s1, 3
  %s188 = scalar_lea.sflag [#allocation2], 3
  %p190 = scmp.lt.u32.totalorder 1, 8
  %p191 = pneg %p190
  // Predicated region
  $region92: #{_lambda_.1} parent=0 // pred_check
    _
  $region93: #{_lambda_.1} parent=0 // pred_check_branch
    %193 = sbr.rel (%p190) target = $region95
  $region94: #{_lambda_.1} parent=0 // pred_region
    %s215 = sand.u32 1, 7
    %p216 = scmp.eq.s32.totalorder %s215, 0
    %p217 = pneg %p216
    // Predicated region
    $region107: #{_lambda_.1} parent=94 // pred_check
      _
    $region108: #{_lambda_.1} parent=94 // pred_check_branch
      %219 = sbr.rel (%p216) target = $region110
    $region109: #{_lambda_.1} parent=94 // pred_region
      %s220 = sand.u32 1, 7
      %s221 = ssub.s32 1, %s220
      %s222 = scalar_lea.vmem %s186, %s221
      %s223 = ssub.s32 1, %s220
      %s224 = scalar_lea.vmem %s187, %s223
      %s225 = sshll.u32 1, %s220
      %s226 = ssub.s32 %s225, 1
      loop: start=0, step=1, limit=1
      $region111: #{_lambda_.1} parent=109 // loop_pre_header
        _
      $region112: #{_lambda_.1} parent=109 // loop_header
        %s228 = sphi 0, %s232
        %p229 = scmp.ge.s32.totalorder %s228, 1
        %s233 = sphi %s222, %s222
        %s234 = sphi %s224, %s224
      $region113: #{_lambda_.1} parent=109 // loop_header_branch
        %231 = sbr.rel (%p229) target = $region117
      $region114: #{_lambda_.1} parent=109 // loop_body
        %v235 = vld [vmem:[%s233] sm:%s226]
        %236 = vst [vmem:[%s234] sm:%s226] %v235
        %v237 = vld [vmem:[%s233 + $0x4] sm:%s226]
        %238 = vst [vmem:[%s234 + $0x4] sm:%s226] %v237
        %v239 = vld [vmem:[%s233 + $0x8] sm:%s226]
        %240 = vst [vmem:[%s234 + $0x8] sm:%s226] %v239
        %v241 = vld [vmem:[%s233 + $0xc] sm:%s226]
        %242 = vst [vmem:[%s234 + $0xc] sm:%s226] %v241
      $region115: #{_lambda_.1} parent=109 // loop_footer
        %s232 = sadd.s32 1, %s228
      $region116: #{_lambda_.1} parent=109 // loop_footer_branch
        %227 = sbr.rel target = $region112
      $region117: #{_lambda_.1} parent=109 // loop_exit
        _
    $region110: #{_lambda_.1} parent=94 // pred_fallthru
      _
  $region95: #{_lambda_.1} parent=0 // pred_fallthru
    _
  // Predicated region
  $region96: #{_lambda_.1} parent=0 // pred_check
    %p194 = pneg %p190
  $region97: #{_lambda_.1} parent=0 // pred_check_branch
    %196 = sbr.rel (%p194) target = $region99
  $region98: #{_lambda_.1} parent=0 // pred_region
    %s197 = sshll.u32 1, 1
    %s198 = ssub.s32 %s197, 1
    loop: start=0, step=1, limit=1
    $region100: #{_lambda_.1} parent=98 // loop_pre_header
      _
    $region101: #{_lambda_.1} parent=98 // loop_header
      %s200 = sphi 0, %s204
      %p201 = scmp.ge.s32.totalorder %s200, 1
      %s205 = sphi %s186, %s186
      %s206 = sphi %s187, %s187
    $region102: #{_lambda_.1} parent=98 // loop_header_branch
      %203 = sbr.rel (%p201) target = $region106
    $region103: #{_lambda_.1} parent=98 // loop_body
      %v207 = vld [vmem:[%s205] sm:%s198]
      %208 = vst [vmem:[%s206] sm:%s198] %v207
      %v209 = vld [vmem:[%s205 + $0x4] sm:%s198]
      %210 = vst [vmem:[%s206 + $0x4] sm:%s198] %v209
      %v211 = vld [vmem:[%s205 + $0x8] sm:%s198]
      %212 = vst [vmem:[%s206 + $0x8] sm:%s198] %v211
      %v213 = vld [vmem:[%s205 + $0xc] sm:%s198]
      %214 = vst [vmem:[%s206 + $0xc] sm:%s198] %v213
    $region104: #{_lambda_.1} parent=98 // loop_footer
      %s204 = sadd.s32 1, %s200
    $region105: #{_lambda_.1} parent=98 // loop_footer_branch
      %199 = sbr.rel target = $region101
    $region106: #{_lambda_.1} parent=98 // loop_exit
      _
  $region99: #{_lambda_.1} parent=0 // pred_fallthru
    _
  // Predicated region
  $region118: #{_lambda_.1} parent=0 // pred_check
    _
  $region119: #{_lambda_.1} parent=0 // pred_check_branch
    %245 = sbr.rel (0) target = $region121
  $region120: #{_lambda_.1} parent=0 // pred_region
    %246 = vsyncadd %s188, 64
  $region121: #{_lambda_.1} parent=0 // pred_fallthru
    _
  %s247 = smul.u32 2, 1
  %s248 = smul.u32 %s247, 2
  %s249 = sshll.u32 %s248, 4
  %250 = dma.done [#allocation2], %s249
  %s251 = sshll.u32 %s248, 4
  %252 = dma.done %s66, %s251
  %s253 = sshll.u32 %s248, 4
  %254 = dma.done %s127, %s253
  %s255 = sshll.u32 %s248, 4
  %256 = dma.done %s188, %s255
  %257 = vsyncmov [#allocation2]
  %s258 = vpop.sfrf %257
  %p259 = scmp.eq.s32.totalorder %s258, 0
  %p260 = pneg %p259
  %262 = shalt.err (%p260)
  %s263 = scalar_lea.sflag [#allocation2], 1
  %264 = vsyncmov %s263
  %s265 = vpop.sfrf %264
  %p266 = scmp.eq.s32.totalorder %s265, 0
  %p267 = pneg %p266
  %269 = shalt.err (%p267)
  %s270 = scalar_lea.sflag [#allocation2], 2
  %271 = vsyncmov %s270
  %s272 = vpop.sfrf %271
  %p273 = scmp.eq.s32.totalorder %s272, 0
  %p274 = pneg %p273
  %276 = shalt.err (%p274)
  %s277 = scalar_lea.sflag [#allocation2], 3
  %278 = vsyncmov %s277
  %s279 = vpop.sfrf %278
  %p280 = scmp.eq.s32.totalorder %s279, 0
  %p281 = pneg %p280
  %283 = shalt.err (%p281)

</llo_original>
